<compile_context>
chip_gen: v7x
topology: tpu7x:2x2x1
jax: 0.10.0
libtpu: 0.0.40
codegen_flags: <defaults>
</compile_context>

<pallas_src>
import functools

import jax
import jax.numpy as jnp
from jax.experimental import pallas as pl
from jax.experimental.pallas import tpu as pltpu

HIDDEN_SIZES = [256, 256]
LN_EPS = 1e-5


def _layernorm(h, gamma, beta):
    # PyTorch nn.LayerNorm: biased variance over the last dim, eps inside rsqrt.
    # One-pass stats: var = E[h^2] - mean^2 (clamped at 0 for numerical safety).
    n = h.shape[-1]
    inv_n = 1.0 / float(n)
    s1 = jnp.sum(h, axis=-1, keepdims=True)
    s2 = jnp.sum(h * h, axis=-1, keepdims=True)
    mean = s1 * inv_n
    var = jnp.maximum(s2 * inv_n - mean * mean, 0.0)
    inv = jax.lax.rsqrt(var + LN_EPS)
    return (h - mean) * inv * gamma + beta


def mlp_kernel(x_ref,
               w1_ref, b1_ref, g1_ref, be1_ref,
               w2_ref, b2_ref, g2_ref, be2_ref,
               w3_ref, b3_ref,
               o_ref):
    # x / weights arrive already in the matmul compute dtype (f32 or bf16);
    # no unconditional cast.  Accumulation is always f32.
    x = x_ref[...]

    # Layer 1: Linear -> LayerNorm -> ReLU
    h = jnp.dot(x, w1_ref[...], preferred_element_type=jnp.float32) + b1_ref[...]
    h = _layernorm(h, g1_ref[...], be1_ref[...])
    h = jnp.maximum(h, 0.0)

    # Layer 2: Linear -> LayerNorm -> ReLU
    h = jnp.dot(h.astype(w2_ref.dtype), w2_ref[...],
                preferred_element_type=jnp.float32) + b2_ref[...]
    h = _layernorm(h, g2_ref[...], be2_ref[...])
    h = jnp.maximum(h, 0.0)

    # Output layer: Linear (activation=None in the module). w3/b3 are lane-padded
    # to a multiple of 128 in the wrapper; padded columns are zero.
    y = jnp.dot(h.astype(w3_ref.dtype), w3_ref[...],
                preferred_element_type=jnp.float32) + b3_ref[...]
    o_ref[...] = y.astype(o_ref.dtype)


@functools.partial(jax.jit, static_argnames=("tile_b", "compute_dtype"))
def mlp_forward(x, params, tile_b=256, compute_dtype=jnp.float32):
    w1, b1, g1, be1, w2, b2, g2, be2, w3, b3 = params
    B, in_f = x.shape
    h1 = w1.shape[1]
    h2 = w2.shape[1]
    out_f = w3.shape[1]

    # ---- Lane-dense output: pad the final layer out to a multiple of 128 lanes ----
    out_p = max(128, ((out_f + 127) // 128) * 128)
    if out_p != out_f:
        w3p = jnp.zeros((h2, out_p), w3.dtype).at[:, :out_f].set(w3)
        b3p = jnp.zeros((1, out_p), b3.dtype).at[:, :out_f].set(b3)
    else:
        w3p, b3p = w3, b3

    # ---- Matmul operands in the MXU compute dtype (bf16 doubles MXU rate on v6e/v7x) ----
    xk = x.astype(compute_dtype)
    w1k = w1.astype(compute_dtype)
    w2k = w2.astype(compute_dtype)
    w3k = w3p.astype(compute_dtype)

    # ---- Batch tiling: big tiles amortize per-step overhead and fill the MXU rows. ----
    tb = min(tile_b, B)
    grid = (pl.cdiv(B, tb),)

    def full(shape):
        # Whole-array block, constant across the batch grid (stays resident in VMEM).
        return pl.BlockSpec(shape, lambda i: tuple(0 for _ in shape))

    out_padded = pl.pallas_call(
        mlp_kernel,
        out_shape=jax.ShapeDtypeStruct((B, out_p), jnp.float32),
        grid_spec=pltpu.PrefetchScalarGridSpec(
            num_scalar_prefetch=0,
            grid=grid,
            in_specs=[
                pl.BlockSpec((tb, in_f), lambda i: (i, 0)),       # x
                full((in_f, h1)), full((1, h1)),                  # w1, b1
                full((1, h1)), full((1, h1)),                     # gamma1, beta1
                full((h1, h2)), full((1, h2)),                    # w2, b2
                full((1, h2)), full((1, h2)),                     # gamma2, beta2
                full((h2, out_p)), full((1, out_p)),              # w3 (padded), b3 (padded)
            ],
            out_specs=pl.BlockSpec((tb, out_p), lambda i: (i, 0)),
        ),
        compiler_params=pltpu.CompilerParams(
            dimension_semantics=("parallel",)),
    )(xk, w1k, b1, g1, be1, w2k, b2, g2, be2, w3k, b3p)

    # Slice off the lane padding.
    return out_padded[:, :out_f]


def init_params(key, input_size, output_size, hidden_sizes):
    """PyTorch-style init: Linear weight/bias ~ U(-1/sqrt(in), 1/sqrt(in));
    LayerNorm gamma=1, beta=0. Weights returned pre-transposed as (in, out)."""
    dims = [input_size] + list(hidden_sizes) + [output_size]
    keys = jax.random.split(key, 2 * (len(dims) - 1))
    params = []
    for li in range(len(dims) - 1):
        fan_in, fan_out = dims[li], dims[li + 1]
        bound = 1.0 / jnp.sqrt(jnp.float32(fan_in))
        w = jax.random.uniform(keys[2 * li], (fan_in, fan_out),
                               minval=-bound, maxval=bound, dtype=jnp.float32)
        b = jax.random.uniform(keys[2 * li + 1], (1, fan_out),
                               minval=-bound, maxval=bound, dtype=jnp.float32)
        params.append((w, b))
    (w1, b1), (w2, b2), (w3, b3) = params
    h1, h2 = hidden_sizes
    g1, be1 = jnp.ones((1, h1), jnp.float32), jnp.zeros((1, h1), jnp.float32)
    g2, be2 = jnp.ones((1, h2), jnp.float32), jnp.zeros((1, h2), jnp.float32)
    return (w1, b1, g1, be1, w2, b2, g2, be2, w3, b3)


def reference_forward(x, params):
    w1, b1, g1, be1, w2, b2, g2, be2, w3, b3 = params

    def ln(h, gamma, beta):
        mean = jnp.mean(h, axis=-1, keepdims=True)
        var = jnp.mean((h - mean) ** 2, axis=-1, keepdims=True)
        return (h - mean) * jax.lax.rsqrt(var + LN_EPS) * gamma + beta

    h = x @ w1 + b1
    h = jnp.maximum(ln(h, g1, be1), 0.0)
    h = h @ w2 + b2
    h = jnp.maximum(ln(h, g2, be2), 0.0)
    return h @ w3 + b3


if __name__ == "__main__":
    key = jax.random.PRNGKey(0)
    k_x, k_p = jax.random.split(key)

    batch = 64
    input_size = 32
    output_size = 16

    x = jax.random.normal(k_x, (batch, input_size), dtype=jnp.float32)
    params = init_params(k_p, input_size, output_size, HIDDEN_SIZES)
    ref = reference_forward(x, params)

    # f32 matmul path, multi-tile grid (2 batch tiles -> both v7x TensorCores get work).
    out_f32 = jax.block_until_ready(
        mlp_forward(x, params, tile_b=32, compute_dtype=jnp.float32))
    assert out_f32.shape == (batch, output_size)
    assert jnp.allclose(out_f32, ref, atol=1e-4, rtol=1e-4)

    # bf16 matmul path (MXU-rate dtype on v5e/v6e/v7x); LN/ReLU math stays f32.
    out_bf16 = jax.block_until_ready(
        mlp_forward(x, params, tile_b=64, compute_dtype=jnp.bfloat16))
    assert out_bf16.shape == (batch, output_size)
    assert jnp.allclose(out_bf16, ref, atol=8e-2, rtol=8e-2)

    print("KERNEL_OK")
</pallas_src>

<mosaic_0001>
module attributes {stable_mosaic.version = 11 : i64} {
  func.func @mlp_kernel(%arg0: i32, %arg1: memref<32x32xf32, #tpu.memory_space<vmem>>, %arg2: memref<32x256xf32, #tpu.memory_space<vmem>>, %arg3: memref<1x256xf32, #tpu.memory_space<vmem>>, %arg4: memref<1x256xf32, #tpu.memory_space<vmem>>, %arg5: memref<1x256xf32, #tpu.memory_space<vmem>>, %arg6: memref<256x256xf32, #tpu.memory_space<vmem>>, %arg7: memref<1x256xf32, #tpu.memory_space<vmem>>, %arg8: memref<1x256xf32, #tpu.memory_space<vmem>>, %arg9: memref<1x256xf32, #tpu.memory_space<vmem>>, %arg10: memref<256x128xf32, #tpu.memory_space<vmem>>, %arg11: memref<1x128xf32, #tpu.memory_space<vmem>>, %arg12: memref<32x128xf32, #tpu.memory_space<vmem>>) attributes {dimension_semantics = [#tpu.dimension_semantics<parallel>], iteration_bounds = array<i64: 2>, scalar_prefetch = 0 : i64, scratch_operands = 0 : i64, tpu.core_type = #tpu.core_type<tc>, window_params = [{transform_indices = @transform_0, window_bounds = array<i64: 32, 32>}, {pipeline_mode = #tpu.pipeline_mode<synchronous>, transform_indices = @transform_1, window_bounds = array<i64: 32, 256>}, {pipeline_mode = #tpu.pipeline_mode<synchronous>, transform_indices = @transform_2, window_bounds = array<i64: 1, 256>}, {pipeline_mode = #tpu.pipeline_mode<synchronous>, transform_indices = @transform_3, window_bounds = array<i64: 1, 256>}, {pipeline_mode = #tpu.pipeline_mode<synchronous>, transform_indices = @transform_4, window_bounds = array<i64: 1, 256>}, {pipeline_mode = #tpu.pipeline_mode<synchronous>, transform_indices = @transform_5, window_bounds = array<i64: 256, 256>}, {pipeline_mode = #tpu.pipeline_mode<synchronous>, transform_indices = @transform_6, window_bounds = array<i64: 1, 256>}, {pipeline_mode = #tpu.pipeline_mode<synchronous>, transform_indices = @transform_7, window_bounds = array<i64: 1, 256>}, {pipeline_mode = #tpu.pipeline_mode<synchronous>, transform_indices = @transform_8, window_bounds = array<i64: 1, 256>}, {pipeline_mode = #tpu.pipeline_mode<synchronous>, transform_indices = @transform_9, window_bounds = array<i64: 256, 128>}, {pipeline_mode = #tpu.pipeline_mode<synchronous>, transform_indices = @transform_10, window_bounds = array<i64: 1, 128>}, {transform_indices = @transform_11, window_bounds = array<i64: 32, 128>}]} {
    %c0 = arith.constant 0 : index
    %c0_0 = arith.constant 0 : index
    %0 = vector.load %arg1[%c0, %c0_0] : memref<32x32xf32, #tpu.memory_space<vmem>>, vector<32x32xf32>
    %c0_1 = arith.constant 0 : index
    %c0_2 = arith.constant 0 : index
    %1 = vector.load %arg2[%c0_1, %c0_2] : memref<32x256xf32, #tpu.memory_space<vmem>>, vector<32x256xf32>
    %cst = arith.constant dense<0.000000e+00> : vector<32x256xf32>
    %2 = tpu.matmul %0, %1, %cst {dimension_numbers = #tpu.dot_dimension_numbers<[1], [0], [0], [1], [0, 0, 1, 1], [], []>} : vector<32x32xf32>, vector<32x256xf32>, vector<32x256xf32> -> vector<32x256xf32>
    %c0_3 = arith.constant 0 : index
    %c0_4 = arith.constant 0 : index
    %3 = vector.load %arg3[%c0_3, %c0_4] : memref<1x256xf32, #tpu.memory_space<vmem>>, vector<1x256xf32>
    %4 = vector.broadcast %3 : vector<1x256xf32> to vector<32x256xf32>
    %5 = arith.addf %2, %4 : vector<32x256xf32>
    %c0_5 = arith.constant 0 : index
    %c0_6 = arith.constant 0 : index
    %6 = vector.load %arg4[%c0_5, %c0_6] : memref<1x256xf32, #tpu.memory_space<vmem>>, vector<1x256xf32>
    %c0_7 = arith.constant 0 : index
    %c0_8 = arith.constant 0 : index
    %7 = vector.load %arg5[%c0_7, %c0_8] : memref<1x256xf32, #tpu.memory_space<vmem>>, vector<1x256xf32>
    %cst_9 = arith.constant dense<0.000000e+00> : vector<32xf32>
    %8 = vector.multi_reduction <add>, %5, %cst_9 [1] : vector<32x256xf32> to vector<32xf32>
    %9 = vector.shape_cast %8 : vector<32xf32> to vector<32x1xf32>
    %10 = arith.mulf %5, %5 : vector<32x256xf32>
    %cst_10 = arith.constant dense<0.000000e+00> : vector<32xf32>
    %11 = vector.multi_reduction <add>, %10, %cst_10 [1] : vector<32x256xf32> to vector<32xf32>
    %12 = vector.shape_cast %11 : vector<32xf32> to vector<32x1xf32>
    %cst_11 = arith.constant 3.906250e-03 : f32
    %13 = vector.broadcast %cst_11 : f32 to vector<32x1xf32>
    %14 = arith.mulf %9, %13 : vector<32x1xf32>
    %cst_12 = arith.constant 3.906250e-03 : f32
    %15 = vector.broadcast %cst_12 : f32 to vector<32x1xf32>
    %16 = arith.mulf %12, %15 : vector<32x1xf32>
    %17 = arith.mulf %14, %14 : vector<32x1xf32>
    %18 = arith.subf %16, %17 : vector<32x1xf32>
    %cst_13 = arith.constant 0.000000e+00 : f32
    %19 = vector.broadcast %cst_13 : f32 to vector<32x1xf32>
    %20 = arith.maximumf %18, %19 : vector<32x1xf32>
    %cst_14 = arith.constant 9.99999974E-6 : f32
    %21 = vector.broadcast %cst_14 : f32 to vector<32x1xf32>
    %22 = arith.addf %20, %21 : vector<32x1xf32>
    %23 = math.rsqrt %22 : vector<32x1xf32>
    %24 = vector.broadcast %14 : vector<32x1xf32> to vector<32x256xf32>
    %25 = arith.subf %5, %24 : vector<32x256xf32>
    %26 = vector.broadcast %23 : vector<32x1xf32> to vector<32x256xf32>
    %27 = arith.mulf %25, %26 : vector<32x256xf32>
    %28 = vector.broadcast %6 : vector<1x256xf32> to vector<32x256xf32>
    %29 = arith.mulf %27, %28 : vector<32x256xf32>
    %30 = vector.broadcast %7 : vector<1x256xf32> to vector<32x256xf32>
    %31 = arith.addf %29, %30 : vector<32x256xf32>
    %cst_15 = arith.constant 0.000000e+00 : f32
    %32 = vector.broadcast %cst_15 : f32 to vector<32x256xf32>
    %33 = arith.maximumf %31, %32 : vector<32x256xf32>
    %c0_16 = arith.constant 0 : index
    %c0_17 = arith.constant 0 : index
    %34 = vector.load %arg6[%c0_16, %c0_17] : memref<256x256xf32, #tpu.memory_space<vmem>>, vector<256x256xf32>
    %cst_18 = arith.constant dense<0.000000e+00> : vector<32x256xf32>
    %35 = tpu.matmul %33, %34, %cst_18 {dimension_numbers = #tpu.dot_dimension_numbers<[1], [0], [0], [1], [0, 0, 1, 1], [], []>} : vector<32x256xf32>, vector<256x256xf32>, vector<32x256xf32> -> vector<32x256xf32>
    %c0_19 = arith.constant 0 : index
    %c0_20 = arith.constant 0 : index
    %36 = vector.load %arg7[%c0_19, %c0_20] : memref<1x256xf32, #tpu.memory_space<vmem>>, vector<1x256xf32>
    %37 = vector.broadcast %36 : vector<1x256xf32> to vector<32x256xf32>
    %38 = arith.addf %35, %37 : vector<32x256xf32>
    %c0_21 = arith.constant 0 : index
    %c0_22 = arith.constant 0 : index
    %39 = vector.load %arg8[%c0_21, %c0_22] : memref<1x256xf32, #tpu.memory_space<vmem>>, vector<1x256xf32>
    %c0_23 = arith.constant 0 : index
    %c0_24 = arith.constant 0 : index
    %40 = vector.load %arg9[%c0_23, %c0_24] : memref<1x256xf32, #tpu.memory_space<vmem>>, vector<1x256xf32>
    %cst_25 = arith.constant dense<0.000000e+00> : vector<32xf32>
    %41 = vector.multi_reduction <add>, %38, %cst_25 [1] : vector<32x256xf32> to vector<32xf32>
    %42 = vector.shape_cast %41 : vector<32xf32> to vector<32x1xf32>
    %43 = arith.mulf %38, %38 : vector<32x256xf32>
    %cst_26 = arith.constant dense<0.000000e+00> : vector<32xf32>
    %44 = vector.multi_reduction <add>, %43, %cst_26 [1] : vector<32x256xf32> to vector<32xf32>
    %45 = vector.shape_cast %44 : vector<32xf32> to vector<32x1xf32>
    %cst_27 = arith.constant 3.906250e-03 : f32
    %46 = vector.broadcast %cst_27 : f32 to vector<32x1xf32>
    %47 = arith.mulf %42, %46 : vector<32x1xf32>
    %cst_28 = arith.constant 3.906250e-03 : f32
    %48 = vector.broadcast %cst_28 : f32 to vector<32x1xf32>
    %49 = arith.mulf %45, %48 : vector<32x1xf32>
    %50 = arith.mulf %47, %47 : vector<32x1xf32>
    %51 = arith.subf %49, %50 : vector<32x1xf32>
    %cst_29 = arith.constant 0.000000e+00 : f32
    %52 = vector.broadcast %cst_29 : f32 to vector<32x1xf32>
    %53 = arith.maximumf %51, %52 : vector<32x1xf32>
    %cst_30 = arith.constant 9.99999974E-6 : f32
    %54 = vector.broadcast %cst_30 : f32 to vector<32x1xf32>
    %55 = arith.addf %53, %54 : vector<32x1xf32>
    %56 = math.rsqrt %55 : vector<32x1xf32>
    %57 = vector.broadcast %47 : vector<32x1xf32> to vector<32x256xf32>
    %58 = arith.subf %38, %57 : vector<32x256xf32>
    %59 = vector.broadcast %56 : vector<32x1xf32> to vector<32x256xf32>
    %60 = arith.mulf %58, %59 : vector<32x256xf32>
    %61 = vector.broadcast %39 : vector<1x256xf32> to vector<32x256xf32>
    %62 = arith.mulf %60, %61 : vector<32x256xf32>
    %63 = vector.broadcast %40 : vector<1x256xf32> to vector<32x256xf32>
    %64 = arith.addf %62, %63 : vector<32x256xf32>
    %cst_31 = arith.constant 0.000000e+00 : f32
    %65 = vector.broadcast %cst_31 : f32 to vector<32x256xf32>
    %66 = arith.maximumf %64, %65 : vector<32x256xf32>
    %c0_32 = arith.constant 0 : index
    %c0_33 = arith.constant 0 : index
    %67 = vector.load %arg10[%c0_32, %c0_33] : memref<256x128xf32, #tpu.memory_space<vmem>>, vector<256x128xf32>
    %cst_34 = arith.constant dense<0.000000e+00> : vector<32x128xf32>
    %68 = tpu.matmul %66, %67, %cst_34 {dimension_numbers = #tpu.dot_dimension_numbers<[1], [0], [0], [1], [0, 0, 1, 1], [], []>} : vector<32x256xf32>, vector<256x128xf32>, vector<32x128xf32> -> vector<32x128xf32>
    %c0_35 = arith.constant 0 : index
    %c0_36 = arith.constant 0 : index
    %69 = vector.load %arg11[%c0_35, %c0_36] : memref<1x128xf32, #tpu.memory_space<vmem>>, vector<1x128xf32>
    %70 = vector.broadcast %69 : vector<1x128xf32> to vector<32x128xf32>
    %71 = arith.addf %68, %70 : vector<32x128xf32>
    %c0_37 = arith.constant 0 : index
    %c0_38 = arith.constant 0 : index
    %72 = vector.load %arg12[%c0_37, %c0_38] : memref<32x128xf32, #tpu.memory_space<vmem>>, vector<32x128xf32>
    tpu.vector_store %arg12[%c0_37, %c0_38], %71 {strides = array<i32>} : memref<32x128xf32, #tpu.memory_space<vmem>>, vector<32x128xf32>,
    return
  }
  func.func @transform_0(%arg0: i32) -> (i32, i32) {
    %c0_i32 = arith.constant 0 : i32
    %c0_i32_0 = arith.constant 0 : i32
    return %arg0, %c0_i32 : i32, i32
  }
  func.func @transform_1(%arg0: i32) -> (i32, i32) {
    %c0_i32 = arith.constant 0 : i32
    %c0_i32_0 = arith.constant 0 : i32
    %c0_i32_1 = arith.constant 0 : i32
    return %c0_i32, %c0_i32_0 : i32, i32
  }
  func.func @transform_2(%arg0: i32) -> (i32, i32) {
    %c0_i32 = arith.constant 0 : i32
    %c0_i32_0 = arith.constant 0 : i32
    %c0_i32_1 = arith.constant 0 : i32
    return %c0_i32, %c0_i32_0 : i32, i32
  }
  func.func @transform_3(%arg0: i32) -> (i32, i32) {
    %c0_i32 = arith.constant 0 : i32
    %c0_i32_0 = arith.constant 0 : i32
    %c0_i32_1 = arith.constant 0 : i32
    return %c0_i32, %c0_i32_0 : i32, i32
  }
  func.func @transform_4(%arg0: i32) -> (i32, i32) {
    %c0_i32 = arith.constant 0 : i32
    %c0_i32_0 = arith.constant 0 : i32
    %c0_i32_1 = arith.constant 0 : i32
    return %c0_i32, %c0_i32_0 : i32, i32
  }
  func.func @transform_5(%arg0: i32) -> (i32, i32) {
    %c0_i32 = arith.constant 0 : i32
    %c0_i32_0 = arith.constant 0 : i32
    %c0_i32_1 = arith.constant 0 : i32
    return %c0_i32, %c0_i32_0 : i32, i32
  }
  func.func @transform_6(%arg0: i32) -> (i32, i32) {
    %c0_i32 = arith.constant 0 : i32
    %c0_i32_0 = arith.constant 0 : i32
    %c0_i32_1 = arith.constant 0 : i32
    return %c0_i32, %c0_i32_0 : i32, i32
  }
  func.func @transform_7(%arg0: i32) -> (i32, i32) {
    %c0_i32 = arith.constant 0 : i32
    %c0_i32_0 = arith.constant 0 : i32
    %c0_i32_1 = arith.constant 0 : i32
    return %c0_i32, %c0_i32_0 : i32, i32
  }
  func.func @transform_8(%arg0: i32) -> (i32, i32) {
    %c0_i32 = arith.constant 0 : i32
    %c0_i32_0 = arith.constant 0 : i32
    %c0_i32_1 = arith.constant 0 : i32
    return %c0_i32, %c0_i32_0 : i32, i32
  }
  func.func @transform_9(%arg0: i32) -> (i32, i32) {
    %c0_i32 = arith.constant 0 : i32
    %c0_i32_0 = arith.constant 0 : i32
    %c0_i32_1 = arith.constant 0 : i32
    return %c0_i32, %c0_i32_0 : i32, i32
  }
  func.func @transform_10(%arg0: i32) -> (i32, i32) {
    %c0_i32 = arith.constant 0 : i32
    %c0_i32_0 = arith.constant 0 : i32
    %c0_i32_1 = arith.constant 0 : i32
    return %c0_i32, %c0_i32_0 : i32, i32
  }
  func.func @transform_11(%arg0: i32) -> (i32, i32) {
    %c0_i32 = arith.constant 0 : i32
    %c0_i32_0 = arith.constant 0 : i32
    return %arg0, %c0_i32 : i32, i32
  }
}

</mosaic_0001>

<llo_original>
// kernel: mlp_forward.1
$region0: #{mlp_forward.1}
  #allocation0 [shape = 'u32[]', space=smem, size = 0x4, offset = 0x4, fixed_abs, tag = 'smem constant byte address 0x4 - core index']
  #allocation1 [shape = 'u32[144,128]{1,0:T(1,128)}', space=vmem, size = 0x12000, scoped, tag = 'internal scratch']
  %s0 = inlined_call_operand.vmem [shape: f32[64,32], index: 0, kind: input, shape index: {}]
  %s1 = inlined_call_operand.vmem [shape: f32[32,256], index: 1, kind: input, shape index: {}]
  %s2 = inlined_call_operand.vmem [shape: f32[1,256], index: 2, kind: input, shape index: {}]
  %s3 = inlined_call_operand.vmem [shape: f32[1,256], index: 3, kind: input, shape index: {}]
  %s4 = inlined_call_operand.vmem [shape: f32[1,256], index: 4, kind: input, shape index: {}]
  %s5 = inlined_call_operand.vmem [shape: f32[256,256], index: 5, kind: input, shape index: {}]
  %s6 = inlined_call_operand.vmem [shape: f32[1,256], index: 6, kind: input, shape index: {}]
  %s7 = inlined_call_operand.vmem [shape: f32[1,256], index: 7, kind: input, shape index: {}]
  %s8 = inlined_call_operand.vmem [shape: f32[1,256], index: 8, kind: input, shape index: {}]
  %s9 = inlined_call_operand.vmem [shape: f32[256,128], index: 9, kind: input, shape index: {}]
  %s10 = inlined_call_operand.vmem [shape: f32[1,128], index: 10, kind: input, shape index: {}]
  %s11 = inlined_call_operand.vmem [shape: f32[64,128], index: 11, kind: output, shape index: {}]
  %s12 = sld [smem:[#allocation0]]
  $region77: #{mlp_forward.1} parent=0
    _
  %s14 = ssub.s32 1, %s12
  %s15 = scalar_select 0, %s14, %s12
  loop: start=0, step=1, limit=4
  $region2: #{mlp_forward.1} parent=0 // loop_pre_header
    _
  $region3: #{mlp_forward.1} parent=0 // loop_header
    %s17 = sphi 0, %s21
    %p18 = scmp.ge.s32.totalorder %s17, 4
    %s27 = sphi 0, %s29
    %s30 = sphi 0, %s27
    %s31 = sphi 0, %s30
    %s47 = sphi 0, %s31
    %s51 = sphi 0, %s51
    %s53 = sphi 0, %s51
    %s54 = sphi 0, %s53
    %s68 = sphi 0, %s54
    %s72 = sphi 0, %s72
    %s74 = sphi 0, %s72
    %s75 = sphi 0, %s74
    %s89 = sphi 0, %s75
    %s93 = sphi 0, %s93
    %s95 = sphi 0, %s93
    %s96 = sphi 0, %s95
    %s110 = sphi 0, %s96
    %s114 = sphi 0, %s114
    %s116 = sphi 0, %s114
    %s117 = sphi 0, %s116
    %s131 = sphi 0, %s117
    %s135 = sphi 0, %s135
    %s137 = sphi 0, %s135
    %s138 = sphi 0, %s137
    %s152 = sphi 0, %s138
    %s156 = sphi 0, %s156
    %s158 = sphi 0, %s156
    %s159 = sphi 0, %s158
    %s173 = sphi 0, %s159
    %s177 = sphi 0, %s177
    %s179 = sphi 0, %s177
    %s180 = sphi 0, %s179
    %s194 = sphi 0, %s180
    %s198 = sphi 0, %s198
    %s200 = sphi 0, %s198
    %s201 = sphi 0, %s200
    %s215 = sphi 0, %s201
    %s219 = sphi 0, %s219
    %s221 = sphi 0, %s219
    %s222 = sphi 0, %s221
    %s236 = sphi 0, %s222
    %s240 = sphi 0, %s240
    %s242 = sphi 0, %s240
    %s243 = sphi 0, %s242
    %s257 = sphi 0, %s243
    %s263 = sphi 0, %s265
    %s266 = sphi 0, %s263
    %s267 = sphi 0, %s266
    %s283 = sphi 0, %s267
  $region4: #{mlp_forward.1} parent=0 // loop_header_branch
    %20 = sbr.rel (%p18) target = $region8
  $region5: #{mlp_forward.1} parent=0 // loop_body
    %s22 = ssub.s32 %s17, 1
    %s23 = ssub.s32 %s17, 2
    %s24 = sadd.s32 %s17, 1
    %s25 = ssub.s32 %s17, %s24
    %p26 = scmp.eq.s32.totalorder %s25, 0
    %s28 = sadd.s32 %s27, 1
    %s29 = scalar_select %p26, %s27, %s28
    %p32 = pneg %p26
    %p33 = scmp.eq.s32.totalorder %s17, 1
    %p34 = por %p32, %p33
    %p35 = scmp.ne.s32.totalorder %s27, %s30
    %p36 = scmp.eq.s32.totalorder %s17, 0
    %p37 = por %p35, %p36
    %p38 = scmp.ne.s32.totalorder %s27, %s30
    %p39 = scmp.eq.s32.totalorder %s22, 1
    %p40 = por %p38, %p39
    %p41 = scmp.ne.s32.totalorder %s30, %s31
    %p42 = scmp.eq.s32.totalorder %s22, 0
    %p43 = por %p41, %p42
    %p44 = scmp.ne.s32.totalorder %s30, %s31
    %p45 = scmp.eq.s32.totalorder %s23, 1
    %p46 = por %p44, %p45
    %p48 = scmp.ne.s32.totalorder %s31, %s47
    %p49 = scmp.eq.s32.totalorder %s23, 0
    %p50 = por %p48, %p49
    %s52 = sadd.s32 %s51, 1
    %p55 = scmp.eq.s32.totalorder %s17, 1
    %p56 = scmp.ne.s32.totalorder %s51, %s53
    %p57 = scmp.eq.s32.totalorder %s17, 0
    %p58 = por %p56, %p57
    %p59 = scmp.ne.s32.totalorder %s51, %s53
    %p60 = scmp.eq.s32.totalorder %s22, 1
    %p61 = por %p59, %p60
    %p62 = scmp.ne.s32.totalorder %s53, %s54
    %p63 = scmp.eq.s32.totalorder %s22, 0
    %p64 = por %p62, %p63
    %p65 = scmp.ne.s32.totalorder %s53, %s54
    %p66 = scmp.eq.s32.totalorder %s23, 1
    %p67 = por %p65, %p66
    %p69 = scmp.ne.s32.totalorder %s54, %s68
    %p70 = scmp.eq.s32.totalorder %s23, 0
    %p71 = por %p69, %p70
    %s73 = sadd.s32 %s72, 1
    %p76 = scmp.eq.s32.totalorder %s17, 1
    %p77 = scmp.ne.s32.totalorder %s72, %s74
    %p78 = scmp.eq.s32.totalorder %s17, 0
    %p79 = por %p77, %p78
    %p80 = scmp.ne.s32.totalorder %s72, %s74
    %p81 = scmp.eq.s32.totalorder %s22, 1
    %p82 = por %p80, %p81
    %p83 = scmp.ne.s32.totalorder %s74, %s75
    %p84 = scmp.eq.s32.totalorder %s22, 0
    %p85 = por %p83, %p84
    %p86 = scmp.ne.s32.totalorder %s74, %s75
    %p87 = scmp.eq.s32.totalorder %s23, 1
    %p88 = por %p86, %p87
    %p90 = scmp.ne.s32.totalorder %s75, %s89
    %p91 = scmp.eq.s32.totalorder %s23, 0
    %p92 = por %p90, %p91
    %s94 = sadd.s32 %s93, 1
    %p97 = scmp.eq.s32.totalorder %s17, 1
    %p98 = scmp.ne.s32.totalorder %s93, %s95
    %p99 = scmp.eq.s32.totalorder %s17, 0
    %p100 = por %p98, %p99
    %p101 = scmp.ne.s32.totalorder %s93, %s95
    %p102 = scmp.eq.s32.totalorder %s22, 1
    %p103 = por %p101, %p102
    %p104 = scmp.ne.s32.totalorder %s95, %s96
    %p105 = scmp.eq.s32.totalorder %s22, 0
    %p106 = por %p104, %p105
    %p107 = scmp.ne.s32.totalorder %s95, %s96
    %p108 = scmp.eq.s32.totalorder %s23, 1
    %p109 = por %p107, %p108
    %p111 = scmp.ne.s32.totalorder %s96, %s110
    %p112 = scmp.eq.s32.totalorder %s23, 0
    %p113 = por %p111, %p112
    %s115 = sadd.s32 %s114, 1
    %p118 = scmp.eq.s32.totalorder %s17, 1
    %p119 = scmp.ne.s32.totalorder %s114, %s116
    %p120 = scmp.eq.s32.totalorder %s17, 0
    %p121 = por %p119, %p120
    %p122 = scmp.ne.s32.totalorder %s114, %s116
    %p123 = scmp.eq.s32.totalorder %s22, 1
    %p124 = por %p122, %p123
    %p125 = scmp.ne.s32.totalorder %s116, %s117
    %p126 = scmp.eq.s32.totalorder %s22, 0
    %p127 = por %p125, %p126
    %p128 = scmp.ne.s32.totalorder %s116, %s117
    %p129 = scmp.eq.s32.totalorder %s23, 1
    %p130 = por %p128, %p129
    %p132 = scmp.ne.s32.totalorder %s117, %s131
    %p133 = scmp.eq.s32.totalorder %s23, 0
    %p134 = por %p132, %p133
    %s136 = sadd.s32 %s135, 1
    %p139 = scmp.eq.s32.totalorder %s17, 1
    %p140 = scmp.ne.s32.totalorder %s135, %s137
    %p141 = scmp.eq.s32.totalorder %s17, 0
    %p142 = por %p140, %p141
    %p143 = scmp.ne.s32.totalorder %s135, %s137
    %p144 = scmp.eq.s32.totalorder %s22, 1
    %p145 = por %p143, %p144
    %p146 = scmp.ne.s32.totalorder %s137, %s138
    %p147 = scmp.eq.s32.totalorder %s22, 0
    %p148 = por %p146, %p147
    %p149 = scmp.ne.s32.totalorder %s137, %s138
    %p150 = scmp.eq.s32.totalorder %s23, 1
    %p151 = por %p149, %p150
    %p153 = scmp.ne.s32.totalorder %s138, %s152
    %p154 = scmp.eq.s32.totalorder %s23, 0
    %p155 = por %p153, %p154
    %s157 = sadd.s32 %s156, 1
    %p160 = scmp.eq.s32.totalorder %s17, 1
    %p161 = scmp.ne.s32.totalorder %s156, %s158
    %p162 = scmp.eq.s32.totalorder %s17, 0
    %p163 = por %p161, %p162
    %p164 = scmp.ne.s32.totalorder %s156, %s158
    %p165 = scmp.eq.s32.totalorder %s22, 1
    %p166 = por %p164, %p165
    %p167 = scmp.ne.s32.totalorder %s158, %s159
    %p168 = scmp.eq.s32.totalorder %s22, 0
    %p169 = por %p167, %p168
    %p170 = scmp.ne.s32.totalorder %s158, %s159
    %p171 = scmp.eq.s32.totalorder %s23, 1
    %p172 = por %p170, %p171
    %p174 = scmp.ne.s32.totalorder %s159, %s173
    %p175 = scmp.eq.s32.totalorder %s23, 0
    %p176 = por %p174, %p175
    %s178 = sadd.s32 %s177, 1
    %p181 = scmp.eq.s32.totalorder %s17, 1
    %p182 = scmp.ne.s32.totalorder %s177, %s179
    %p183 = scmp.eq.s32.totalorder %s17, 0
    %p184 = por %p182, %p183
    %p185 = scmp.ne.s32.totalorder %s177, %s179
    %p186 = scmp.eq.s32.totalorder %s22, 1
    %p187 = por %p185, %p186
    %p188 = scmp.ne.s32.totalorder %s179, %s180
    %p189 = scmp.eq.s32.totalorder %s22, 0
    %p190 = por %p188, %p189
    %p191 = scmp.ne.s32.totalorder %s179, %s180
    %p192 = scmp.eq.s32.totalorder %s23, 1
    %p193 = por %p191, %p192
    %p195 = scmp.ne.s32.totalorder %s180, %s194
    %p196 = scmp.eq.s32.totalorder %s23, 0
    %p197 = por %p195, %p196
    %s199 = sadd.s32 %s198, 1
    %p202 = scmp.eq.s32.totalorder %s17, 1
    %p203 = scmp.ne.s32.totalorder %s198, %s200
    %p204 = scmp.eq.s32.totalorder %s17, 0
    %p205 = por %p203, %p204
    %p206 = scmp.ne.s32.totalorder %s198, %s200
    %p207 = scmp.eq.s32.totalorder %s22, 1
    %p208 = por %p206, %p207
    %p209 = scmp.ne.s32.totalorder %s200, %s201
    %p210 = scmp.eq.s32.totalorder %s22, 0
    %p211 = por %p209, %p210
    %p212 = scmp.ne.s32.totalorder %s200, %s201
    %p213 = scmp.eq.s32.totalorder %s23, 1
    %p214 = por %p212, %p213
    %p216 = scmp.ne.s32.totalorder %s201, %s215
    %p217 = scmp.eq.s32.totalorder %s23, 0
    %p218 = por %p216, %p217
    %s220 = sadd.s32 %s219, 1
    %p223 = scmp.eq.s32.totalorder %s17, 1
    %p224 = scmp.ne.s32.totalorder %s219, %s221
    %p225 = scmp.eq.s32.totalorder %s17, 0
    %p226 = por %p224, %p225
    %p227 = scmp.ne.s32.totalorder %s219, %s221
    %p228 = scmp.eq.s32.totalorder %s22, 1
    %p229 = por %p227, %p228
    %p230 = scmp.ne.s32.totalorder %s221, %s222
    %p231 = scmp.eq.s32.totalorder %s22, 0
    %p232 = por %p230, %p231
    %p233 = scmp.ne.s32.totalorder %s221, %s222
    %p234 = scmp.eq.s32.totalorder %s23, 1
    %p235 = por %p233, %p234
    %p237 = scmp.ne.s32.totalorder %s222, %s236
    %p238 = scmp.eq.s32.totalorder %s23, 0
    %p239 = por %p237, %p238
    %s241 = sadd.s32 %s240, 1
    %p244 = scmp.eq.s32.totalorder %s17, 1
    %p245 = scmp.ne.s32.totalorder %s240, %s242
    %p246 = scmp.eq.s32.totalorder %s17, 0
    %p247 = por %p245, %p246
    %p248 = scmp.ne.s32.totalorder %s240, %s242
    %p249 = scmp.eq.s32.totalorder %s22, 1
    %p250 = por %p248, %p249
    %p251 = scmp.ne.s32.totalorder %s242, %s243
    %p252 = scmp.eq.s32.totalorder %s22, 0
    %p253 = por %p251, %p252
    %p254 = scmp.ne.s32.totalorder %s242, %s243
    %p255 = scmp.eq.s32.totalorder %s23, 1
    %p256 = por %p254, %p255
    %p258 = scmp.ne.s32.totalorder %s243, %s257
    %p259 = scmp.eq.s32.totalorder %s23, 0
    %p260 = por %p258, %p259
    %s261 = ssub.s32 %s17, %s24
    %p262 = scmp.eq.s32.totalorder %s261, 0
    %s264 = sadd.s32 %s263, 1
    %s265 = scalar_select %p262, %s263, %s264
    %p268 = pneg %p262
    %p269 = scmp.eq.s32.totalorder %s17, 1
    %p270 = por %p268, %p269
    %p271 = scmp.ne.s32.totalorder %s263, %s266
    %p272 = scmp.eq.s32.totalorder %s17, 0
    %p273 = por %p271, %p272
    %p274 = scmp.ne.s32.totalorder %s263, %s266
    %p275 = scmp.eq.s32.totalorder %s22, 1
    %p276 = por %p274, %p275
    %p277 = scmp.ne.s32.totalorder %s266, %s267
    %p278 = scmp.eq.s32.totalorder %s22, 0
    %p279 = por %p277, %p278
    %p280 = scmp.ne.s32.totalorder %s266, %s267
    %p281 = scmp.eq.s32.totalorder %s23, 1
    %p282 = por %p280, %p281
    %p284 = scmp.ne.s32.totalorder %s267, %s283
    %p285 = scmp.eq.s32.totalorder %s23, 0
    %p286 = por %p284, %p285
    %p287 = scmp.le.s32.totalorder 1, %s17
    %p288 = scmp.lt.s32.totalorder %s17, 3
    %p289 = pnand %p287, %p288
    %p290 = pneg %p289
    // Predicated region
    $region9: #{mlp_forward.1} parent=5 // pred_check
      _
    $region10: #{mlp_forward.1} parent=5 // pred_check_branch
      %292 = sbr.rel (%p289) target = $region12
    $region11: #{mlp_forward.1} parent=5 // pred_region
      %s293 = ssub.s32 %s17, 1
      // Predicated region
      $region13: #{mlp_forward.1} parent=11 // pred_check
        %p294 = pneg %p64
      $region14: #{mlp_forward.1} parent=11 // pred_check_branch
        %296 = sbr.rel (%p294) target = $region16
      $region15: #{mlp_forward.1} parent=11 // pred_region
        _
      $region16: #{mlp_forward.1} parent=11 // pred_fallthru
        _
      // Predicated region
      $region17: #{mlp_forward.1} parent=11 // pred_check
        %p297 = pneg %p85
      $region18: #{mlp_forward.1} parent=11 // pred_check_branch
        %299 = sbr.rel (%p297) target = $region20
      $region19: #{mlp_forward.1} parent=11 // pred_region
        _
      $region20: #{mlp_forward.1} parent=11 // pred_fallthru
        _
      // Predicated region
      $region21: #{mlp_forward.1} parent=11 // pred_check
        %p300 = pneg %p106
      $region22: #{mlp_forward.1} parent=11 // pred_check_branch
        %302 = sbr.rel (%p300) target = $region24
      $region23: #{mlp_forward.1} parent=11 // pred_region
        _
      $region24: #{mlp_forward.1} parent=11 // pred_fallthru
        _
      // Predicated region
      $region25: #{mlp_forward.1} parent=11 // pred_check
        %p303 = pneg %p127
      $region26: #{mlp_forward.1} parent=11 // pred_check_branch
        %305 = sbr.rel (%p303) target = $region28
      $region27: #{mlp_forward.1} parent=11 // pred_region
        _
      $region28: #{mlp_forward.1} parent=11 // pred_fallthru
        _
      // Predicated region
      $region29: #{mlp_forward.1} parent=11 // pred_check
        %p306 = pneg %p148
      $region30: #{mlp_forward.1} parent=11 // pred_check_branch
        %308 = sbr.rel (%p306) target = $region32
      $region31: #{mlp_forward.1} parent=11 // pred_region
        _
      $region32: #{mlp_forward.1} parent=11 // pred_fallthru
        _
      // Predicated region
      $region33: #{mlp_forward.1} parent=11 // pred_check
        %p309 = pneg %p169
      $region34: #{mlp_forward.1} parent=11 // pred_check_branch
        %311 = sbr.rel (%p309) target = $region36
      $region35: #{mlp_forward.1} parent=11 // pred_region
        _
      $region36: #{mlp_forward.1} parent=11 // pred_fallthru
        _
      // Predicated region
      $region37: #{mlp_forward.1} parent=11 // pred_check
        %p312 = pneg %p190
      $region38: #{mlp_forward.1} parent=11 // pred_check_branch
        %314 = sbr.rel (%p312) target = $region40
      $region39: #{mlp_forward.1} parent=11 // pred_region
        _
      $region40: #{mlp_forward.1} parent=11 // pred_fallthru
        _
      // Predicated region
      $region41: #{mlp_forward.1} parent=11 // pred_check
        %p315 = pneg %p211
      $region42: #{mlp_forward.1} parent=11 // pred_check_branch
        %317 = sbr.rel (%p315) target = $region44
      $region43: #{mlp_forward.1} parent=11 // pred_region
        _
      $region44: #{mlp_forward.1} parent=11 // pred_fallthru
        _
      // Predicated region
      $region45: #{mlp_forward.1} parent=11 // pred_check
        %p318 = pneg %p232
      $region46: #{mlp_forward.1} parent=11 // pred_check_branch
        %320 = sbr.rel (%p318) target = $region48
      $region47: #{mlp_forward.1} parent=11 // pred_region
        _
      $region48: #{mlp_forward.1} parent=11 // pred_fallthru
        _
      // Predicated region
      $region49: #{mlp_forward.1} parent=11 // pred_check
        %p321 = pneg %p253
      $region50: #{mlp_forward.1} parent=11 // pred_check_branch
        %323 = sbr.rel (%p321) target = $region52
      $region51: #{mlp_forward.1} parent=11 // pred_region
        _
      $region52: #{mlp_forward.1} parent=11 // pred_fallthru
        _
    $region12: #{mlp_forward.1} parent=5 // pred_fallthru
      _
    %p324 = scmp.lt.s32.totalorder %s17, 2
    // Predicated region
    $region53: #{mlp_forward.1} parent=5 // pred_check
      %p325 = pneg %p324
    $region54: #{mlp_forward.1} parent=5 // pred_check_branch
      %327 = sbr.rel (%p325) target = $region56
    $region55: #{mlp_forward.1} parent=5 // pred_region
      // Predicated region
      $region57: #{mlp_forward.1} parent=55 // pred_check
        %p328 = pneg %p37
      $region58: #{mlp_forward.1} parent=55 // pred_check_branch
        %330 = sbr.rel (%p328) target = $region60
      $region59: #{mlp_forward.1} parent=55 // pred_region
        %s331 = smul.u32 4, %s17
        %p332 = scmp.lt.s32.totalorder %s331, 7
        %s333 = scalar_select %p332, %s331, 7
        %s334 = smul.addr %s333, 8
        %s335 = scalar_lea.vmem %s0, %s334
        %s336 = smul.u32 4, %s17
      $region60: #{mlp_forward.1} parent=55 // pred_fallthru
        _
    $region56: #{mlp_forward.1} parent=5 // pred_fallthru
      _
    %p337 = scmp.le.s32.totalorder 1, %s17
    %p338 = scmp.lt.s32.totalorder %s17, 3
    %p339 = pnand %p337, %p338
    %p340 = pneg %p339
    // Predicated region
    $region61: #{mlp_forward.1} parent=5 // pred_check
      _
    $region62: #{mlp_forward.1} parent=5 // pred_check_branch
      %342 = sbr.rel (%p339) target = $region64
    $region63: #{mlp_forward.1} parent=5 // pred_region
      %s343 = ssub.s32 %s17, 1
      %s344 = smul.u32 4, %s22
      %p345 = scmp.lt.s32.totalorder %s344, 7
      %s346 = scalar_select %p345, %s344, 7
      %s347 = smul.addr %s346, 8
      %s348 = scalar_lea.vmem %s0, %s347
      %p349 = pneg %p43
      %p350 = pneg %p40
      %p351 = pneg %p64
      %p352 = pneg %p61
      %p353 = pneg %p85
      %p354 = pneg %p82
      %p355 = pneg %p106
      %p356 = pneg %p103
      %p357 = pneg %p127
      %p358 = pneg %p124
      %p359 = pneg %p148
      %p360 = pneg %p145
      %p361 = pneg %p169
      %p362 = pneg %p166
      %p363 = pneg %p190
      %p364 = pneg %p187
      %p365 = pneg %p211
      %p366 = pneg %p208
      %p367 = pneg %p232
      %p368 = pneg %p229
      %p369 = pneg %p253
      %p370 = pneg %p250
      %p371 = pneg %p279
      %p372 = pneg %p276
      %s373 = smul.u32 4, %s22
      %p374 = scmp.lt.s32.totalorder %s373, 7
      %s375 = scalar_select %p374, %s373, 7
      %s376 = smul.addr %s375, 8
      %s377 = scalar_lea.vmem %s11, %s376
      %s378 = smul.u32 4, %s22
      %p379 = scmp.lt.s32.totalorder %s378, 7
      %s380 = scalar_select %p379, %s378, 7
      %s381 = smul.addr %s380, 8
      %s382 = scalar_lea.vmem %s0, %s381
      %s383 = smul.u32 4, %s22
      %s384 = smul.u32 4, %s22
      %p385 = scmp.lt.s32.totalorder %s384, 7
      %s386 = scalar_select %p385, %s384, 7
      %s387 = smul.addr %s386, 8
      %s388 = scalar_lea.vmem %s11, %s387
      %s389 = smul.u32 4, %s22
      %v390 = vld [vmem:[%s382] sm:$0xff]
      %v391 = vld [vmem:[%s382 + $0x8] sm:$0xff]
      %v392 = vld [vmem:[%s382 + $0x10] sm:$0xff]
      %v393 = vld [vmem:[%s382 + $0x18] sm:$0xff]
      %v394 = vld [vmem:[%s1] sm:$0xff]
      %v395 = vld [vmem:[%s1 + $0x8] sm:$0xff]
      %v396 = vld [vmem:[%s1 + $0x10] sm:$0xff]
      %v397 = vld [vmem:[%s1 + $0x18] sm:$0xff]
      %v398 = vld [vmem:[%s1 + $0x20] sm:$0xff]
      %v399 = vld [vmem:[%s1 + $0x28] sm:$0xff]
      %v400 = vld [vmem:[%s1 + $0x30] sm:$0xff]
      %v401 = vld [vmem:[%s1 + $0x38] sm:$0xff]
      %v402 = vld [vmem:[%s2] sm:$0x3]
      %v404 = vlaneseq
      %v405 = vshrl.u32 %v404, 7
      %v406 = vsub.s32 0, %v405
      %v407 = vrot.slane %v402, %v406
      %v408 = vlaneseq
      %v409 = vshrl.u32 %v408, 7
      %v410 = vsub.s32 1, %v409
      %v411 = vrot.slane %v402, %v410
      %vm414 = vcmask 261120
      %v416 = vsel %vm414, %v390, 0
      %v419 = vsel %vm414, %v391, 0
      %v422 = vsel %vm414, %v392, 0
      %v425 = vsel %vm414, %v393, 0
      %427 = vmatprep.subr.mxu0 %v395
      %428 = vmatpush1.msra.mxu0 %v394
      %429 = vmatprep.subr.mxu0 %v397
      %430 = vmatpush1.msra.mxu0 %v396
      %431 = vmatprep.subr.mxu0 %v399
      %432 = vmatpush1.msra.mxu0 %v398
      %433 = vmatprep.subr.mxu0 %v401
      %434 = vmatpush1.msra.mxu0 %v400
      %435 = vmatprep.subr.mxu0 0.0
      %436 = vmatpush1.msra.mxu0 0.0
      %437 = vmatprep.subr.mxu0 0.0
      %438 = vmatpush1.msra.mxu0 0.0
      %439 = vmatprep.subr.mxu0 0.0
      %440 = vmatpush1.msra.mxu0 0.0
      %441 = vmatprep.subr.mxu0 0.0
      %442 = vmatpush1.msra.mxu0 0.0
      %443 = vmatprep.subr.mxu0 0.0
      %444 = vmatpush1.msra.mxu0 0.0
      %445 = vmatprep.subr.mxu0 0.0
      %446 = vmatpush1.msra.mxu0 0.0
      %447 = vmatprep.subr.mxu0 0.0
      %448 = vmatpush1.msra.mxu0 0.0
      %449 = vmatprep.subr.mxu0 0.0
      %450 = vmatpush1.msra.mxu0 0.0
      %451 = vmatprep.subr.mxu0 0.0
      %452 = vmatpush1.msra.mxu0 0.0
      %453 = vmatprep.subr.mxu0 0.0
      %454 = vmatpush1.msra.mxu0 0.0
      %455 = vmatprep.subr.mxu0 0.0
      %456 = vmatpush1.msra.mxu0 0.0
      %457 = vmatprep.subr.mxu0 0.0
      %458 = vmatpush1.msra.mxu0 0.0
      %459 = vmatprep.subr.mxu0 0.0
      %460 = vmatpush1.msra.mxu0 0.0
      %461 = vmatprep.subr.mxu0 0.0
      %462 = vmatpush1.msra.mxu0 0.0
      %463 = vmatprep.subr.mxu0 0.0
      %464 = vmatpush1.msra.mxu0 0.0
      %465 = vmatprep.subr.mxu0 0.0
      %466 = vmatpush1.msra.mxu0 0.0
      %467 = vmatprep.subr.mxu0 0.0
      %468 = vmatpush1.msra.mxu0 0.0
      %469 = vmatprep.subr.mxu0 0.0
      %470 = vmatpush1.msra.mxu0 0.0
      %471 = vmatprep.subr.mxu0 0.0
      %472 = vmatpush1.msra.mxu0 0.0
      %473 = vmatprep.subr.mxu0 0.0
      %474 = vmatpush1.msra.mxu0 0.0
      %475 = vmatprep.subr.mxu0 0.0
      %476 = vmatpush1.msra.mxu0 0.0
      %477 = vmatprep.subr.mxu0 0.0
      %478 = vmatpush1.msra.mxu0 0.0
      %479 = vmatprep.subr.mxu0 0.0
      %480 = vmatpush1.msra.mxu0 0.0
      %481 = vmatprep.subr.mxu0 0.0
      %482 = vmatpush1.msra.mxu0 0.0
      %483 = vmatprep.subr.mxu0 0.0
      %484 = vmatpush1.msra.mxu0 0.0
      %485 = vmatprep.subr.mxu0 0.0
      %486 = vmatpush1.msra.mxu0 0.0
      %487 = vmatprep.subr.mxu0 0.0
      %488 = vmatpush1.msra.mxu0 0.0
      %489 = vmatprep.subr.mxu0 0.0
      %490 = vmatpush1.msra.mxu0 0.0
      %491 = vmatprep.mubr.f32.mxu0 0.0
      %492 = vmatmul.mubr.f32.gmra.mrb[0].mxu0 %v416
      %v493 = vpop.f32.mrb[0].mxu0
      %v494 = vadd.f32 %v407, %v493
      %v495 = vpop.f32.mrb[0].mxu0
      %v496 = vadd.f32 %v411, %v495
      %497 = vmatprep.mubr.f32.mxu0 0.0
      %498 = vmatmul.mubr.f32.gmra.mrb[0].mxu0 %v419
      %v499 = vpop.f32.mrb[0].mxu0
      %v500 = vadd.f32 %v407, %v499
      %v501 = vpop.f32.mrb[0].mxu0
      %v502 = vadd.f32 %v411, %v501
      %503 = vmatprep.mubr.f32.mxu0 0.0
      %504 = vmatmul.mubr.f32.gmra.mrb[0].mxu0 %v422
      %v505 = vpop.f32.mrb[0].mxu0
      %v506 = vadd.f32 %v407, %v505
      %v507 = vpop.f32.mrb[0].mxu0
      %v508 = vadd.f32 %v411, %v507
      %509 = vmatprep.mubr.f32.mxu0 0.0
      %510 = vmatmul.mubr.f32.gmra.mrb[0].mxu0 %v425
      %v511 = vpop.f32.mrb[0].mxu0
      %v512 = vadd.f32 %v407, %v511
      %v513 = vpop.f32.mrb[0].mxu0
      %v514 = vadd.f32 %v411, %v513
      %515 = vdwg.mxu0
      %v516 = vld [vmem:[%s3] sm:$0x3]
      %v517 = vld [vmem:[%s4] sm:$0x3]
      %v518 = vadd.f32 %v494, %v496
      %519 = vadd.xlane.f32.xlu0 %v518
      %v520 = vpop.xlane.xlu0 %519
      %v521 = vadd.f32 %v500, %v502
      %522 = vadd.xlane.f32.xlu0 %v521
      %v523 = vpop.xlane.xlu0 %522
      %v524 = vadd.f32 %v506, %v508
      %525 = vadd.xlane.f32.xlu0 %v524
      %v526 = vpop.xlane.xlu0 %525
      %v527 = vadd.f32 %v512, %v514
      %528 = vadd.xlane.f32.xlu0 %v527
      %v529 = vpop.xlane.xlu0 %528
      %v530 = vmul.f32 %v494, %v494
      %v531 = vmul.f32 %v496, %v496
      %v532 = vmul.f32 %v500, %v500
      %v533 = vmul.f32 %v502, %v502
      %v534 = vmul.f32 %v506, %v506
      %v535 = vmul.f32 %v508, %v508
      %v536 = vmul.f32 %v512, %v512
      %v537 = vmul.f32 %v514, %v514
      %v538 = vadd.f32 %v530, %v531
      %539 = vadd.xlane.f32.xlu0 %v538
      %v540 = vpop.xlane.xlu0 %539
      %v541 = vadd.f32 %v532, %v533
      %542 = vadd.xlane.f32.xlu0 %v541
      %v543 = vpop.xlane.xlu0 %542
      %v544 = vadd.f32 %v534, %v535
      %545 = vadd.xlane.f32.xlu0 %v544
      %v546 = vpop.xlane.xlu0 %545
      %v547 = vadd.f32 %v536, %v537
      %548 = vadd.xlane.f32.xlu0 %v547
      %v549 = vpop.xlane.xlu0 %548
      %v550 = vmul.f32 %v520, 0.00390625
      %v551 = vmul.f32 %v523, 0.00390625
      %v552 = vmul.f32 %v526, 0.00390625
      %v553 = vmul.f32 %v529, 0.00390625
      %v554 = vmul.f32 %v540, 0.00390625
      %v555 = vmul.f32 %v543, 0.00390625
      %v556 = vmul.f32 %v546, 0.00390625
      %v557 = vmul.f32 %v549, 0.00390625
      %v558 = vmul.f32 %v550, %v550
      %v559 = vmul.f32 %v551, %v551
      %v560 = vmul.f32 %v552, %v552
      %v561 = vmul.f32 %v553, %v553
      %v562 = vsub.f32 %v554, %v558
      %v563 = vsub.f32 %v555, %v559
      %v564 = vsub.f32 %v556, %v560
      %v565 = vsub.f32 %v557, %v561
      %v566 = vmax.f32 %v562, 0.0
      %v567 = vmax.f32 %v563, 0.0
      %v568 = vmax.f32 %v564, 0.0
      %v569 = vmax.f32 %v565, 0.0
      %v570 = vadd.f32 %v566, 1e-05
      %v571 = vadd.f32 %v567, 1e-05
      %v572 = vadd.f32 %v568, 1e-05
      %v573 = vadd.f32 %v569, 1e-05
      %v574 = vrsqrt.pop %v570
      %v575 = vrsqrt.pop %v571
      %v576 = vrsqrt.pop %v572
      %v577 = vrsqrt.pop %v573
      %v578 = vsub.f32 %v494, %v550
      %v579 = vsub.f32 %v496, %v550
      %v580 = vsub.f32 %v500, %v551
      %v581 = vsub.f32 %v502, %v551
      %v582 = vsub.f32 %v506, %v552
      %v583 = vsub.f32 %v508, %v552
      %v584 = vsub.f32 %v512, %v553
      %v585 = vsub.f32 %v514, %v553
      %v586 = vmul.f32 %v578, %v574
      %v587 = vmul.f32 %v579, %v574
      %v588 = vmul.f32 %v580, %v575
      %v589 = vmul.f32 %v581, %v575
      %v590 = vmul.f32 %v582, %v576
      %v591 = vmul.f32 %v583, %v576
      %v592 = vmul.f32 %v584, %v577
      %v593 = vmul.f32 %v585, %v577
      %v595 = vlaneseq
      %v596 = vshrl.u32 %v595, 7
      %v597 = vsub.s32 0, %v596
      %v598 = vrot.slane %v516, %v597
      %v599 = vlaneseq
      %v600 = vshrl.u32 %v599, 7
      %v601 = vsub.s32 1, %v600
      %v602 = vrot.slane %v516, %v601
      %v605 = vmul.f32 %v586, %v598
      %v606 = vmul.f32 %v587, %v602
      %v607 = vmul.f32 %v588, %v598
      %v608 = vmul.f32 %v589, %v602
      %v609 = vmul.f32 %v590, %v598
      %v610 = vmul.f32 %v591, %v602
      %v611 = vmul.f32 %v592, %v598
      %v612 = vmul.f32 %v593, %v602
      %v614 = vlaneseq
      %v615 = vshrl.u32 %v614, 7
      %v616 = vsub.s32 0, %v615
      %v617 = vrot.slane %v517, %v616
      %v618 = vlaneseq
      %v619 = vshrl.u32 %v618, 7
      %v620 = vsub.s32 1, %v619
      %v621 = vrot.slane %v517, %v620
      %v624 = vadd.f32 %v605, %v617
      %v625 = vadd.f32 %v606, %v621
      %v626 = vadd.f32 %v607, %v617
      %v627 = vadd.f32 %v608, %v621
      %v628 = vadd.f32 %v609, %v617
      %v629 = vadd.f32 %v610, %v621
      %v630 = vadd.f32 %v611, %v617
      %v631 = vadd.f32 %v612, %v621
      %v632 = vmax.f32 %v624, 0.0
      %v633 = vmax.f32 %v625, 0.0
      %v634 = vmax.f32 %v626, 0.0
      %v635 = vmax.f32 %v627, 0.0
      %v636 = vmax.f32 %v628, 0.0
      %v637 = vmax.f32 %v629, 0.0
      %v638 = vmax.f32 %v630, 0.0
      %v639 = vmax.f32 %v631, 0.0
      %v640 = vld [vmem:[%s5] sm:$0xff]
      %v641 = vld [vmem:[%s5 + $0x8] sm:$0xff]
      %v642 = vld [vmem:[%s5 + $0x10] sm:$0xff]
      %v643 = vld [vmem:[%s5 + $0x18] sm:$0xff]
      %v644 = vld [vmem:[%s5 + $0x20] sm:$0xff]
      %v645 = vld [vmem:[%s5 + $0x28] sm:$0xff]
      %v646 = vld [vmem:[%s5 + $0x30] sm:$0xff]
      %v647 = vld [vmem:[%s5 + $0x38] sm:$0xff]
      %v648 = vld [vmem:[%s5 + $0x40] sm:$0xff]
      %v649 = vld [vmem:[%s5 + $0x48] sm:$0xff]
      %v650 = vld [vmem:[%s5 + $0x50] sm:$0xff]
      %v651 = vld [vmem:[%s5 + $0x58] sm:$0xff]
      %v652 = vld [vmem:[%s5 + $0x60] sm:$0xff]
      %v653 = vld [vmem:[%s5 + $0x68] sm:$0xff]
      %v654 = vld [vmem:[%s5 + $0x70] sm:$0xff]
      %v655 = vld [vmem:[%s5 + $0x78] sm:$0xff]
      %v656 = vld [vmem:[%s5 + $0x80] sm:$0xff]
      %v657 = vld [vmem:[%s5 + $0x88] sm:$0xff]
      %v658 = vld [vmem:[%s5 + $0x90] sm:$0xff]
      %v659 = vld [vmem:[%s5 + $0x98] sm:$0xff]
      %v660 = vld [vmem:[%s5 + $0xa0] sm:$0xff]
      %v661 = vld [vmem:[%s5 + $0xa8] sm:$0xff]
      %v662 = vld [vmem:[%s5 + $0xb0] sm:$0xff]
      %v663 = vld [vmem:[%s5 + $0xb8] sm:$0xff]
      %v664 = vld [vmem:[%s5 + $0xc0] sm:$0xff]
      %v665 = vld [vmem:[%s5 + $0xc8] sm:$0xff]
      %v666 = vld [vmem:[%s5 + $0xd0] sm:$0xff]
      %v667 = vld [vmem:[%s5 + $0xd8] sm:$0xff]
      %v668 = vld [vmem:[%s5 + $0xe0] sm:$0xff]
      %v669 = vld [vmem:[%s5 + $0xe8] sm:$0xff]
      %v670 = vld [vmem:[%s5 + $0xf0] sm:$0xff]
      %v671 = vld [vmem:[%s5 + $0xf8] sm:$0xff]
      %v672 = vld [vmem:[%s5 + $0x100] sm:$0xff]
      %v673 = vld [vmem:[%s5 + $0x108] sm:$0xff]
      %v674 = vld [vmem:[%s5 + $0x110] sm:$0xff]
      %v675 = vld [vmem:[%s5 + $0x118] sm:$0xff]
      %v676 = vld [vmem:[%s5 + $0x120] sm:$0xff]
      %v677 = vld [vmem:[%s5 + $0x128] sm:$0xff]
      %v678 = vld [vmem:[%s5 + $0x130] sm:$0xff]
      %v679 = vld [vmem:[%s5 + $0x138] sm:$0xff]
      %v680 = vld [vmem:[%s5 + $0x140] sm:$0xff]
      %v681 = vld [vmem:[%s5 + $0x148] sm:$0xff]
      %v682 = vld [vmem:[%s5 + $0x150] sm:$0xff]
      %v683 = vld [vmem:[%s5 + $0x158] sm:$0xff]
      %v684 = vld [vmem:[%s5 + $0x160] sm:$0xff]
      %v685 = vld [vmem:[%s5 + $0x168] sm:$0xff]
      %v686 = vld [vmem:[%s5 + $0x170] sm:$0xff]
      %v687 = vld [vmem:[%s5 + $0x178] sm:$0xff]
      %v688 = vld [vmem:[%s5 + $0x180] sm:$0xff]
      %v689 = vld [vmem:[%s5 + $0x188] sm:$0xff]
      %v690 = vld [vmem:[%s5 + $0x190] sm:$0xff]
      %v691 = vld [vmem:[%s5 + $0x198] sm:$0xff]
      %v692 = vld [vmem:[%s5 + $0x1a0] sm:$0xff]
      %v693 = vld [vmem:[%s5 + $0x1a8] sm:$0xff]
      %v694 = vld [vmem:[%s5 + $0x1b0] sm:$0xff]
      %v695 = vld [vmem:[%s5 + $0x1b8] sm:$0xff]
      %v696 = vld [vmem:[%s5 + $0x1c0] sm:$0xff]
      %v697 = vld [vmem:[%s5 + $0x1c8] sm:$0xff]
      %v698 = vld [vmem:[%s5 + $0x1d0] sm:$0xff]
      %v699 = vld [vmem:[%s5 + $0x1d8] sm:$0xff]
      %v700 = vld [vmem:[%s5 + $0x1e0] sm:$0xff]
      %v701 = vld [vmem:[%s5 + $0x1e8] sm:$0xff]
      %v702 = vld [vmem:[%s5 + $0x1f0] sm:$0xff]
      %v703 = vld [vmem:[%s5 + $0x1f8] sm:$0xff]
      %v704 = vld [vmem:[%s6] sm:$0x3]
      %v706 = vlaneseq
      %v707 = vshrl.u32 %v706, 7
      %v708 = vsub.s32 0, %v707
      %v709 = vrot.slane %v704, %v708
      %v710 = vlaneseq
      %v711 = vshrl.u32 %v710, 7
      %v712 = vsub.s32 1, %v711
      %v713 = vrot.slane %v704, %v712
      %716 = vmatprep.subr.mxu0 %v641
      %717 = vmatpush1.msra.mxu0 %v640
      %718 = vmatprep.subr.mxu0 %v643
      %719 = vmatpush1.msra.mxu0 %v642
      %720 = vmatprep.subr.mxu0 %v645
      %721 = vmatpush1.msra.mxu0 %v644
      %722 = vmatprep.subr.mxu0 %v647
      %723 = vmatpush1.msra.mxu0 %v646
      %724 = vmatprep.subr.mxu0 %v649
      %725 = vmatpush1.msra.mxu0 %v648
      %726 = vmatprep.subr.mxu0 %v651
      %727 = vmatpush1.msra.mxu0 %v650
      %728 = vmatprep.subr.mxu0 %v653
      %729 = vmatpush1.msra.mxu0 %v652
      %730 = vmatprep.subr.mxu0 %v655
      %731 = vmatpush1.msra.mxu0 %v654
      %732 = vmatprep.subr.mxu0 %v657
      %733 = vmatpush1.msra.mxu0 %v656
      %734 = vmatprep.subr.mxu0 %v659
      %735 = vmatpush1.msra.mxu0 %v658
      %736 = vmatprep.subr.mxu0 %v661
      %737 = vmatpush1.msra.mxu0 %v660
      %738 = vmatprep.subr.mxu0 %v663
      %739 = vmatpush1.msra.mxu0 %v662
      %740 = vmatprep.subr.mxu0 %v665
      %741 = vmatpush1.msra.mxu0 %v664
      %742 = vmatprep.subr.mxu0 %v667
      %743 = vmatpush1.msra.mxu0 %v666
      %744 = vmatprep.subr.mxu0 %v669
      %745 = vmatpush1.msra.mxu0 %v668
      %746 = vmatprep.subr.mxu0 %v671
      %747 = vmatpush1.msra.mxu0 %v670
      %748 = vmatprep.subr.mxu0 %v673
      %749 = vmatpush1.msra.mxu0 %v672
      %750 = vmatprep.subr.mxu0 %v675
      %751 = vmatpush1.msra.mxu0 %v674
      %752 = vmatprep.subr.mxu0 %v677
      %753 = vmatpush1.msra.mxu0 %v676
      %754 = vmatprep.subr.mxu0 %v679
      %755 = vmatpush1.msra.mxu0 %v678
      %756 = vmatprep.subr.mxu0 %v681
      %757 = vmatpush1.msra.mxu0 %v680
      %758 = vmatprep.subr.mxu0 %v683
      %759 = vmatpush1.msra.mxu0 %v682
      %760 = vmatprep.subr.mxu0 %v685
      %761 = vmatpush1.msra.mxu0 %v684
      %762 = vmatprep.subr.mxu0 %v687
      %763 = vmatpush1.msra.mxu0 %v686
      %764 = vmatprep.subr.mxu0 %v689
      %765 = vmatpush1.msra.mxu0 %v688
      %766 = vmatprep.subr.mxu0 %v691
      %767 = vmatpush1.msra.mxu0 %v690
      %768 = vmatprep.subr.mxu0 %v693
      %769 = vmatpush1.msra.mxu0 %v692
      %770 = vmatprep.subr.mxu0 %v695
      %771 = vmatpush1.msra.mxu0 %v694
      %772 = vmatprep.subr.mxu0 %v697
      %773 = vmatpush1.msra.mxu0 %v696
      %774 = vmatprep.subr.mxu0 %v699
      %775 = vmatpush1.msra.mxu0 %v698
      %776 = vmatprep.subr.mxu0 %v701
      %777 = vmatpush1.msra.mxu0 %v700
      %778 = vmatprep.subr.mxu0 %v703
      %779 = vmatpush1.msra.mxu0 %v702
      %780 = vmatprep.mubr.f32.mxu0 %v633
      %781 = vmatmul.mubr.f32.gmra.mrb[0].mxu0 %v632
      %v782 = vpop.f32.mrb[0].mxu0
      %v783 = vadd.f32 %v709, %v782
      %v784 = vpop.f32.mrb[0].mxu0
      %v785 = vadd.f32 %v713, %v784
      %786 = vmatprep.mubr.f32.mxu0 %v635
      %787 = vmatmul.mubr.f32.gmra.mrb[0].mxu0 %v634
      %v788 = vpop.f32.mrb[0].mxu0
      %v789 = vadd.f32 %v709, %v788
      %v790 = vpop.f32.mrb[0].mxu0
      %v791 = vadd.f32 %v713, %v790
      %792 = vmatprep.mubr.f32.mxu0 %v637
      %793 = vmatmul.mubr.f32.gmra.mrb[0].mxu0 %v636
      %v794 = vpop.f32.mrb[0].mxu0
      %v795 = vadd.f32 %v709, %v794
      %v796 = vpop.f32.mrb[0].mxu0
      %v797 = vadd.f32 %v713, %v796
      %798 = vmatprep.mubr.f32.mxu0 %v639
      %799 = vmatmul.mubr.f32.gmra.mrb[0].mxu0 %v638
      %v800 = vpop.f32.mrb[0].mxu0
      %v801 = vadd.f32 %v709, %v800
      %v802 = vpop.f32.mrb[0].mxu0
      %v803 = vadd.f32 %v713, %v802
      %804 = vdwg.mxu0
      %v805 = vld [vmem:[%s7] sm:$0x3]
      %v806 = vld [vmem:[%s8] sm:$0x3]
      %v807 = vadd.f32 %v783, %v785
      %808 = vadd.xlane.f32.xlu0 %v807
      %v809 = vpop.xlane.xlu0 %808
      %v810 = vadd.f32 %v789, %v791
      %811 = vadd.xlane.f32.xlu0 %v810
      %v812 = vpop.xlane.xlu0 %811
      %v813 = vadd.f32 %v795, %v797
      %814 = vadd.xlane.f32.xlu0 %v813
      %v815 = vpop.xlane.xlu0 %814
      %v816 = vadd.f32 %v801, %v803
      %817 = vadd.xlane.f32.xlu0 %v816
      %v818 = vpop.xlane.xlu0 %817
      %v819 = vmul.f32 %v783, %v783
      %v820 = vmul.f32 %v785, %v785
      %v821 = vmul.f32 %v789, %v789
      %v822 = vmul.f32 %v791, %v791
      %v823 = vmul.f32 %v795, %v795
      %v824 = vmul.f32 %v797, %v797
      %v825 = vmul.f32 %v801, %v801
      %v826 = vmul.f32 %v803, %v803
      %v827 = vadd.f32 %v819, %v820
      %828 = vadd.xlane.f32.xlu0 %v827
      %v829 = vpop.xlane.xlu0 %828
      %v830 = vadd.f32 %v821, %v822
      %831 = vadd.xlane.f32.xlu0 %v830
      %v832 = vpop.xlane.xlu0 %831
      %v833 = vadd.f32 %v823, %v824
      %834 = vadd.xlane.f32.xlu0 %v833
      %v835 = vpop.xlane.xlu0 %834
      %v836 = vadd.f32 %v825, %v826
      %837 = vadd.xlane.f32.xlu0 %v836
      %v838 = vpop.xlane.xlu0 %837
      %v839 = vmul.f32 %v809, 0.00390625
      %v840 = vmul.f32 %v812, 0.00390625
      %v841 = vmul.f32 %v815, 0.00390625
      %v842 = vmul.f32 %v818, 0.00390625
      %v843 = vmul.f32 %v829, 0.00390625
      %v844 = vmul.f32 %v832, 0.00390625
      %v845 = vmul.f32 %v835, 0.00390625
      %v846 = vmul.f32 %v838, 0.00390625
      %v847 = vmul.f32 %v839, %v839
      %v848 = vmul.f32 %v840, %v840
      %v849 = vmul.f32 %v841, %v841
      %v850 = vmul.f32 %v842, %v842
      %v851 = vsub.f32 %v843, %v847
      %v852 = vsub.f32 %v844, %v848
      %v853 = vsub.f32 %v845, %v849
      %v854 = vsub.f32 %v846, %v850
      %v855 = vmax.f32 %v851, 0.0
      %v856 = vmax.f32 %v852, 0.0
      %v857 = vmax.f32 %v853, 0.0
      %v858 = vmax.f32 %v854, 0.0
      %v859 = vadd.f32 %v855, 1e-05
      %v860 = vadd.f32 %v856, 1e-05
      %v861 = vadd.f32 %v857, 1e-05
      %v862 = vadd.f32 %v858, 1e-05
      %v863 = vrsqrt.pop %v859
      %v864 = vrsqrt.pop %v860
      %v865 = vrsqrt.pop %v861
      %v866 = vrsqrt.pop %v862
      %v867 = vsub.f32 %v783, %v839
      %v868 = vsub.f32 %v785, %v839
      %v869 = vsub.f32 %v789, %v840
      %v870 = vsub.f32 %v791, %v840
      %v871 = vsub.f32 %v795, %v841
      %v872 = vsub.f32 %v797, %v841
      %v873 = vsub.f32 %v801, %v842
      %v874 = vsub.f32 %v803, %v842
      %v875 = vmul.f32 %v867, %v863
      %v876 = vmul.f32 %v868, %v863
      %v877 = vmul.f32 %v869, %v864
      %v878 = vmul.f32 %v870, %v864
      %v879 = vmul.f32 %v871, %v865
      %v880 = vmul.f32 %v872, %v865
      %v881 = vmul.f32 %v873, %v866
      %v882 = vmul.f32 %v874, %v866
      %v884 = vlaneseq
      %v885 = vshrl.u32 %v884, 7
      %v886 = vsub.s32 0, %v885
      %v887 = vrot.slane %v805, %v886
      %v888 = vlaneseq
      %v889 = vshrl.u32 %v888, 7
      %v890 = vsub.s32 1, %v889
      %v891 = vrot.slane %v805, %v890
      %v894 = vmul.f32 %v875, %v887
      %v895 = vmul.f32 %v876, %v891
      %v896 = vmul.f32 %v877, %v887
      %v897 = vmul.f32 %v878, %v891
      %v898 = vmul.f32 %v879, %v887
      %v899 = vmul.f32 %v880, %v891
      %v900 = vmul.f32 %v881, %v887
      %v901 = vmul.f32 %v882, %v891
      %v903 = vlaneseq
      %v904 = vshrl.u32 %v903, 7
      %v905 = vsub.s32 0, %v904
      %v906 = vrot.slane %v806, %v905
      %v907 = vlaneseq
      %v908 = vshrl.u32 %v907, 7
      %v909 = vsub.s32 1, %v908
      %v910 = vrot.slane %v806, %v909
      %v913 = vadd.f32 %v894, %v906
      %v914 = vadd.f32 %v895, %v910
      %v915 = vadd.f32 %v896, %v906
      %v916 = vadd.f32 %v897, %v910
      %v917 = vadd.f32 %v898, %v906
      %v918 = vadd.f32 %v899, %v910
      %v919 = vadd.f32 %v900, %v906
      %v920 = vadd.f32 %v901, %v910
      %v921 = vmax.f32 %v913, 0.0
      %v922 = vmax.f32 %v914, 0.0
      %v923 = vmax.f32 %v915, 0.0
      %v924 = vmax.f32 %v916, 0.0
      %v925 = vmax.f32 %v917, 0.0
      %v926 = vmax.f32 %v918, 0.0
      %v927 = vmax.f32 %v919, 0.0
      %v928 = vmax.f32 %v920, 0.0
      %v929 = vld [vmem:[%s9] sm:$0xff]
      %v930 = vld [vmem:[%s9 + $0x8] sm:$0xff]
      %v931 = vld [vmem:[%s9 + $0x10] sm:$0xff]
      %v932 = vld [vmem:[%s9 + $0x18] sm:$0xff]
      %v933 = vld [vmem:[%s9 + $0x20] sm:$0xff]
      %v934 = vld [vmem:[%s9 + $0x28] sm:$0xff]
      %v935 = vld [vmem:[%s9 + $0x30] sm:$0xff]
      %v936 = vld [vmem:[%s9 + $0x38] sm:$0xff]
      %v937 = vld [vmem:[%s9 + $0x40] sm:$0xff]
      %v938 = vld [vmem:[%s9 + $0x48] sm:$0xff]
      %v939 = vld [vmem:[%s9 + $0x50] sm:$0xff]
      %v940 = vld [vmem:[%s9 + $0x58] sm:$0xff]
      %v941 = vld [vmem:[%s9 + $0x60] sm:$0xff]
      %v942 = vld [vmem:[%s9 + $0x68] sm:$0xff]
      %v943 = vld [vmem:[%s9 + $0x70] sm:$0xff]
      %v944 = vld [vmem:[%s9 + $0x78] sm:$0xff]
      %v945 = vld [vmem:[%s9 + $0x80] sm:$0xff]
      %v946 = vld [vmem:[%s9 + $0x88] sm:$0xff]
      %v947 = vld [vmem:[%s9 + $0x90] sm:$0xff]
      %v948 = vld [vmem:[%s9 + $0x98] sm:$0xff]
      %v949 = vld [vmem:[%s9 + $0xa0] sm:$0xff]
      %v950 = vld [vmem:[%s9 + $0xa8] sm:$0xff]
      %v951 = vld [vmem:[%s9 + $0xb0] sm:$0xff]
      %v952 = vld [vmem:[%s9 + $0xb8] sm:$0xff]
      %v953 = vld [vmem:[%s9 + $0xc0] sm:$0xff]
      %v954 = vld [vmem:[%s9 + $0xc8] sm:$0xff]
      %v955 = vld [vmem:[%s9 + $0xd0] sm:$0xff]
      %v956 = vld [vmem:[%s9 + $0xd8] sm:$0xff]
      %v957 = vld [vmem:[%s9 + $0xe0] sm:$0xff]
      %v958 = vld [vmem:[%s9 + $0xe8] sm:$0xff]
      %v959 = vld [vmem:[%s9 + $0xf0] sm:$0xff]
      %v960 = vld [vmem:[%s9 + $0xf8] sm:$0xff]
      %v961 = vld [vmem:[%s10] sm:$0x1]
      %v963 = vlaneseq
      %v964 = vshrl.u32 %v963, 7
      %v965 = vsub.s32 0, %v964
      %v966 = vrot.slane %v961, %v965
      %968 = vmatprep.subr.mxu0 0.0
      %969 = vmatpush1.msra.mxu0 %v929
      %970 = vmatprep.subr.mxu0 0.0
      %971 = vmatpush1.msra.mxu0 %v930
      %972 = vmatprep.subr.mxu0 0.0
      %973 = vmatpush1.msra.mxu0 %v931
      %974 = vmatprep.subr.mxu0 0.0
      %975 = vmatpush1.msra.mxu0 %v932
      %976 = vmatprep.subr.mxu0 0.0
      %977 = vmatpush1.msra.mxu0 %v933
      %978 = vmatprep.subr.mxu0 0.0
      %979 = vmatpush1.msra.mxu0 %v934
      %980 = vmatprep.subr.mxu0 0.0
      %981 = vmatpush1.msra.mxu0 %v935
      %982 = vmatprep.subr.mxu0 0.0
      %983 = vmatpush1.msra.mxu0 %v936
      %984 = vmatprep.subr.mxu0 0.0
      %985 = vmatpush1.msra.mxu0 %v937
      %986 = vmatprep.subr.mxu0 0.0
      %987 = vmatpush1.msra.mxu0 %v938
      %988 = vmatprep.subr.mxu0 0.0
      %989 = vmatpush1.msra.mxu0 %v939
      %990 = vmatprep.subr.mxu0 0.0
      %991 = vmatpush1.msra.mxu0 %v940
      %992 = vmatprep.subr.mxu0 0.0
      %993 = vmatpush1.msra.mxu0 %v941
      %994 = vmatprep.subr.mxu0 0.0
      %995 = vmatpush1.msra.mxu0 %v942
      %996 = vmatprep.subr.mxu0 0.0
      %997 = vmatpush1.msra.mxu0 %v943
      %998 = vmatprep.subr.mxu0 0.0
      %999 = vmatpush1.msra.mxu0 %v944
      %1000 = vmatprep.subr.mxu0 0.0
      %1001 = vmatpush1.msra.mxu0 %v945
      %1002 = vmatprep.subr.mxu0 0.0
      %1003 = vmatpush1.msra.mxu0 %v946
      %1004 = vmatprep.subr.mxu0 0.0
      %1005 = vmatpush1.msra.mxu0 %v947
      %1006 = vmatprep.subr.mxu0 0.0
      %1007 = vmatpush1.msra.mxu0 %v948
      %1008 = vmatprep.subr.mxu0 0.0
      %1009 = vmatpush1.msra.mxu0 %v949
      %1010 = vmatprep.subr.mxu0 0.0
      %1011 = vmatpush1.msra.mxu0 %v950
      %1012 = vmatprep.subr.mxu0 0.0
      %1013 = vmatpush1.msra.mxu0 %v951
      %1014 = vmatprep.subr.mxu0 0.0
      %1015 = vmatpush1.msra.mxu0 %v952
      %1016 = vmatprep.subr.mxu0 0.0
      %1017 = vmatpush1.msra.mxu0 %v953
      %1018 = vmatprep.subr.mxu0 0.0
      %1019 = vmatpush1.msra.mxu0 %v954
      %1020 = vmatprep.subr.mxu0 0.0
      %1021 = vmatpush1.msra.mxu0 %v955
      %1022 = vmatprep.subr.mxu0 0.0
      %1023 = vmatpush1.msra.mxu0 %v956
      %1024 = vmatprep.subr.mxu0 0.0
      %1025 = vmatpush1.msra.mxu0 %v957
      %1026 = vmatprep.subr.mxu0 0.0
      %1027 = vmatpush1.msra.mxu0 %v958
      %1028 = vmatprep.subr.mxu0 0.0
      %1029 = vmatpush1.msra.mxu0 %v959
      %1030 = vmatprep.subr.mxu0 0.0
      %1031 = vmatpush1.msra.mxu0 %v960
      %1032 = vmatprep.mubr.f32.mxu0 %v922
      %1033 = vmatmul.mubr.f32.gmra.mrb[0].mxu0 %v921
      %v1034 = vpop.f32.mrb[0].mxu0
      %v1035 = vadd.f32 %v966, %v1034
      %v1036 = vpop.f32.mrb[0].mxu0
      %1037 = vmatprep.mubr.f32.mxu0 %v924
      %1038 = vmatmul.mubr.f32.gmra.mrb[0].mxu0 %v923
      %v1039 = vpop.f32.mrb[0].mxu0
      %v1040 = vadd.f32 %v966, %v1039
      %v1041 = vpop.f32.mrb[0].mxu0
      %1042 = vmatprep.mubr.f32.mxu0 %v926
      %1043 = vmatmul.mubr.f32.gmra.mrb[0].mxu0 %v925
      %v1044 = vpop.f32.mrb[0].mxu0
      %v1045 = vadd.f32 %v966, %v1044
      %v1046 = vpop.f32.mrb[0].mxu0
      %1047 = vmatprep.mubr.f32.mxu0 %v928
      %1048 = vmatmul.mubr.f32.gmra.mrb[0].mxu0 %v927
      %v1049 = vpop.f32.mrb[0].mxu0
      %v1050 = vadd.f32 %v966, %v1049
      %v1051 = vpop.f32.mrb[0].mxu0
      %1052 = vdwg.mxu0
      %1053 = vst [vmem:[%s388] sm:$0xff] %v1035
      %1054 = vst [vmem:[%s388 + $0x8] sm:$0xff] %v1040
      %1055 = vst [vmem:[%s388 + $0x10] sm:$0xff] %v1045
      %1056 = vst [vmem:[%s388 + $0x18] sm:$0xff] %v1050
      %s1057 = smul.u32 4, %s22
      %p1058 = scmp.lt.s32.totalorder %s1057, 7
      %s1059 = scalar_select %p1058, %s1057, 7
      %s1060 = smul.addr %s1059, 8
      %s1061 = scalar_lea.vmem %s11, %s1060
      // Predicated region
      $region65: #{mlp_forward.1} parent=63 // pred_check
        %p1062 = pneg %p276
      $region66: #{mlp_forward.1} parent=63 // pred_check_branch
        %1064 = sbr.rel (%p1062) target = $region68
      $region67: #{mlp_forward.1} parent=63 // pred_region
        %s1065 = smul.u32 4, %s22
      $region68: #{mlp_forward.1} parent=63 // pred_fallthru
        _
    $region64: #{mlp_forward.1} parent=5 // pred_fallthru
      _
    %p1066 = scmp.le.s32.totalorder 2, %s17
    // Predicated region
    $region69: #{mlp_forward.1} parent=5 // pred_check
      %p1067 = pneg %p1066
    $region70: #{mlp_forward.1} parent=5 // pred_check_branch
      %1069 = sbr.rel (%p1067) target = $region72
    $region71: #{mlp_forward.1} parent=5 // pred_region
      %s1070 = ssub.s32 %s17, 2
      // Predicated region
      $region73: #{mlp_forward.1} parent=71 // pred_check
        %p1071 = pneg %p282
      $region74: #{mlp_forward.1} parent=71 // pred_check_branch
        %1073 = sbr.rel (%p1071) target = $region76
      $region75: #{mlp_forward.1} parent=71 // pred_region
        %s1074 = smul.u32 4, %s23
        %p1075 = scmp.lt.s32.totalorder %s1074, 7
        %s1076 = scalar_select %p1075, %s1074, 7
        %s1077 = smul.addr %s1076, 8
        %s1078 = scalar_lea.vmem %s11, %s1077
      $region76: #{mlp_forward.1} parent=71 // pred_fallthru
        _
    $region72: #{mlp_forward.1} parent=5 // pred_fallthru
      _
  $region6: #{mlp_forward.1} parent=0 // loop_footer
    %s21 = sadd.s32 1, %s17
  $region7: #{mlp_forward.1} parent=0 // loop_footer_branch
    %16 = sbr.rel target = $region3
  $region8: #{mlp_forward.1} parent=0 // loop_exit
    _

</llo_original>
